<compile_context>
chip_gen: v6e
topology: v6e:2x2x1
jax: 0.10.0
libtpu: 0.0.40
codegen_flags: <defaults>
</compile_context>

<pallas_src>
import jax
import jax.numpy as jnp
from jax.experimental import pallas as pl
from jax.experimental.pallas import tpu as pltpu


def _round_up(x, m):
    return (x + m - 1) // m * m


def fused_mlp_kernel(xp_ref, w1_ref, b1_ref, w2_ref, b2_ref, w34_ref, b34_ref,
                     out_ref):
    # xp_ref: (tr, P*32) packed input rows.  All weights are block-diagonal
    # (pack factor P), so each of the P sub-slots is an independent copy of the
    # original MLP; no cross-row mixing occurs.
    h1 = jnp.dot(xp_ref[...], w1_ref[...],
                 preferred_element_type=jnp.float32) + b1_ref[...]
    h1 = jnp.maximum(h1, 0.0)                                   # (tr, P*50)
    h2 = jnp.dot(h1, w2_ref[...],
                 preferred_element_type=jnp.float32) + b2_ref[...]
    h2 = jnp.maximum(h2, 0.0)                                   # (tr, P*25)
    out = jnp.dot(h2, w34_ref[...],
                  preferred_element_type=jnp.float32) + b34_ref[...]
    out_ref[...] = out.astype(out_ref.dtype)                    # (tr, P)


def template_subspace_fusion_forward(tab1, tab2, kernel_params, *,
                                     pack=8, max_tile_b=4096,
                                     min_grid_steps=2):
    """tab1: (B, d1), tab2: (B, d2) float32 -> [ (B, 1) prediction ]."""
    B, d1 = tab1.shape
    _, d2 = tab2.shape
    D = d1 + d2
    P = pack
    w1b, b1b, w2b, b2b, w34b, b34b = kernel_params
    assert w1b.shape == (P * D, P * 50)

    # --- batch tile selection ------------------------------------------------
    # row_unit keeps the packed row count a multiple of 8 (sublane alignment).
    row_unit = 8 * P
    b_unit = _round_up(B, row_unit)
    max_tile_b = _round_up(max_tile_b, row_unit)
    tb = min(max_tile_b, b_unit)
    # Guarantee >= min_grid_steps grid steps when the batch allows it, so the
    # "parallel" axis can shard across both TensorCores on v7x.
    if b_unit > row_unit and b_unit // tb < min_grid_steps:
        tb = max(row_unit,
                 _round_up((b_unit + min_grid_steps - 1) // min_grid_steps,
                           row_unit))
    b_pad = _round_up(B, tb)
    tr = tb // P                     # packed rows per grid step
    grid = (b_pad // tb,)

    # --- pack inputs: concat features, pad batch, fold 8 rows into the lanes --
    x = jnp.concatenate([tab1, tab2], axis=1)            # (B, D) single K=32 dot
    if b_pad != B:
        x = jnp.pad(x, ((0, b_pad - B), (0, 0)))
    xp = x.reshape(b_pad // P, P * D)                     # row-major, free

    def resident(shape):
        # Constant block index -> weight stays VMEM-resident across grid steps.
        return pl.BlockSpec(shape, lambda i: (0, 0))

    out_packed = pl.pallas_call(
        fused_mlp_kernel,
        out_shape=jax.ShapeDtypeStruct((b_pad // P, P), jnp.float32),
        grid=grid,
        in_specs=[
            pl.BlockSpec((tr, P * D), lambda i: (i, 0)),
            resident(w1b.shape), resident(b1b.shape),
            resident(w2b.shape), resident(b2b.shape),
            resident(w34b.shape), resident(b34b.shape),
        ],
        out_specs=pl.BlockSpec((tr, P), lambda i: (i, 0)),
        compiler_params=pltpu.CompilerParams(
            dimension_semantics=("parallel",),
            vmem_limit_bytes=32 * 1024 * 1024),
    )(xp, w1b, b1b, w2b, b2b, w34b, b34b)

    # (b_pad/P, P) row-major flatten == original batch order; drop padded tail.
    pred = out_packed.reshape(b_pad, 1)[:B]
    return [pred]


def init_params(key, d1, d2):
    """Per-layer parameters matching the PyTorch module's layer shapes."""
    ks = jax.random.split(key, 8)
    # pred_model: Linear(d1+d2, 50) -> ReLU -> Linear(50, 25) -> ReLU -> Linear(25, 5)
    w1 = jax.random.normal(ks[0], (d1 + d2, 50), jnp.float32) * 0.05
    b1 = jax.random.normal(ks[1], (1, 50), jnp.float32) * 0.05
    w2 = jax.random.normal(ks[2], (50, 25), jnp.float32) * 0.05
    b2 = jax.random.normal(ks[3], (1, 25), jnp.float32) * 0.05
    w3 = jax.random.normal(ks[4], (25, 5), jnp.float32) * 0.05
    b3 = jax.random.normal(ks[5], (1, 5), jnp.float32) * 0.05
    # final_prediction (set_final_pred_layers(input_dim=5)): Linear(5, 1)
    w4 = jax.random.normal(ks[6], (5, 1), jnp.float32) * 0.05
    b4 = jax.random.normal(ks[7], (1, 1), jnp.float32) * 0.05
    return (w1, b1, w2, b2, w3, b3, w4, b4)


def prepare_kernel_params(raw_params, *, pack=8):
    """Fold Linear(25,5)+Linear(5,1) and build block-diagonal packed weights."""
    w1, b1, w2, b2, w3, b3, w4, b4 = raw_params
    # No ReLU between layer 3 and the final prediction -> fold into Linear(25,1).
    w34 = w3 @ w4                    # (25, 1)
    b34 = b3 @ w4 + b4               # (1, 1)

    def bdiag(w):
        return jax.scipy.linalg.block_diag(*([w] * pack))

    w1b = bdiag(w1)                  # (P*(d1+d2), P*50)
    w2b = bdiag(w2)                  # (P*50,      P*25)
    w34b = bdiag(w34)                # (P*25,      P)
    b1b = jnp.tile(b1, (1, pack))    # (1, P*50)
    b2b = jnp.tile(b2, (1, pack))    # (1, P*25)
    b34b = jnp.tile(b34, (1, pack))  # (1, P)
    return (w1b, b1b, w2b, b2b, w34b, b34b)


if __name__ == "__main__":
    B, d1, d2 = 10, 16, 16  # tabular_tabular example: data_dims = (16, 16)
    key = jax.random.PRNGKey(0)
    k_x1, k_x2, k_p = jax.random.split(key, 3)
    tab1 = jax.random.normal(k_x1, (B, d1), jnp.float32)
    tab2 = jax.random.normal(k_x2, (B, d2), jnp.float32)
    raw_params = init_params(k_p, d1, d2)
    kernel_params = prepare_kernel_params(raw_params, pack=8)

    out = template_subspace_fusion_forward(tab1, tab2, kernel_params, pack=8)
    jax.block_until_ready(out[0])

    # pure-JAX reference (unfolded layers, same math as the PyTorch module)
    w1, b1, w2, b2, w3, b3, w4, b4 = raw_params
    x = jnp.concatenate([tab1, tab2], axis=1)
    h = jnp.maximum(x @ w1 + b1, 0.0)
    h = jnp.maximum(h @ w2 + b2, 0.0)
    h = h @ w3 + b3
    ref = h @ w4 + b4
    assert out[0].shape == (B, 1)
    assert jnp.allclose(out[0], ref, atol=1e-5), "mismatch vs reference"

    print("KERNEL_OK")
</pallas_src>

<mosaic_0001>
module attributes {stable_mosaic.version = 11 : i64} {
  func.func @fused_mlp_kernel(%arg0: i32, %arg1: memref<8x256xf32, #tpu.memory_space<vmem>>, %arg2: memref<256x400xf32, #tpu.memory_space<vmem>>, %arg3: memref<1x400xf32, #tpu.memory_space<vmem>>, %arg4: memref<400x200xf32, #tpu.memory_space<vmem>>, %arg5: memref<1x200xf32, #tpu.memory_space<vmem>>, %arg6: memref<200x8xf32, #tpu.memory_space<vmem>>, %arg7: memref<1x8xf32, #tpu.memory_space<vmem>>, %arg8: memref<8x8xf32, #tpu.memory_space<vmem>>) attributes {dimension_semantics = [#tpu.dimension_semantics<parallel>], iteration_bounds = array<i64: 1>, scalar_prefetch = 0 : i64, scratch_operands = 0 : i64, tpu.core_type = #tpu.core_type<tc>, window_params = [{transform_indices = @transform_0, window_bounds = array<i64: 8, 256>}, {pipeline_mode = #tpu.pipeline_mode<synchronous>, transform_indices = @transform_1, window_bounds = array<i64: 256, 400>}, {pipeline_mode = #tpu.pipeline_mode<synchronous>, transform_indices = @transform_2, window_bounds = array<i64: 1, 400>}, {pipeline_mode = #tpu.pipeline_mode<synchronous>, transform_indices = @transform_3, window_bounds = array<i64: 400, 200>}, {pipeline_mode = #tpu.pipeline_mode<synchronous>, transform_indices = @transform_4, window_bounds = array<i64: 1, 200>}, {pipeline_mode = #tpu.pipeline_mode<synchronous>, transform_indices = @transform_5, window_bounds = array<i64: 200, 8>}, {pipeline_mode = #tpu.pipeline_mode<synchronous>, transform_indices = @transform_6, window_bounds = array<i64: 1, 8>}, {transform_indices = @transform_7, window_bounds = array<i64: 8, 8>}]} {
    %c0 = arith.constant 0 : index
    %c0_0 = arith.constant 0 : index
    %0 = vector.load %arg1[%c0, %c0_0] : memref<8x256xf32, #tpu.memory_space<vmem>>, vector<8x256xf32>
    %c0_1 = arith.constant 0 : index
    %c0_2 = arith.constant 0 : index
    %1 = vector.load %arg2[%c0_1, %c0_2] : memref<256x400xf32, #tpu.memory_space<vmem>>, vector<256x400xf32>
    %cst = arith.constant dense<0.000000e+00> : vector<8x400xf32>
    %2 = tpu.matmul %0, %1, %cst {dimension_numbers = #tpu.dot_dimension_numbers<[1], [0], [0], [1], [0, 0, 1, 1], [], []>} : vector<8x256xf32>, vector<256x400xf32>, vector<8x400xf32> -> vector<8x400xf32>
    %c0_3 = arith.constant 0 : index
    %c0_4 = arith.constant 0 : index
    %3 = vector.load %arg3[%c0_3, %c0_4] : memref<1x400xf32, #tpu.memory_space<vmem>>, vector<1x400xf32>
    %4 = vector.broadcast %3 : vector<1x400xf32> to vector<8x400xf32>
    %5 = arith.addf %2, %4 : vector<8x400xf32>
    %cst_5 = arith.constant 0.000000e+00 : f32
    %6 = vector.broadcast %cst_5 : f32 to vector<8x400xf32>
    %7 = arith.maximumf %5, %6 : vector<8x400xf32>
    %c0_6 = arith.constant 0 : index
    %c0_7 = arith.constant 0 : index
    %8 = vector.load %arg4[%c0_6, %c0_7] : memref<400x200xf32, #tpu.memory_space<vmem>>, vector<400x200xf32>
    %cst_8 = arith.constant dense<0.000000e+00> : vector<8x200xf32>
    %9 = tpu.matmul %7, %8, %cst_8 {dimension_numbers = #tpu.dot_dimension_numbers<[1], [0], [0], [1], [0, 0, 1, 1], [], []>} : vector<8x400xf32>, vector<400x200xf32>, vector<8x200xf32> -> vector<8x200xf32>
    %c0_9 = arith.constant 0 : index
    %c0_10 = arith.constant 0 : index
    %10 = vector.load %arg5[%c0_9, %c0_10] : memref<1x200xf32, #tpu.memory_space<vmem>>, vector<1x200xf32>
    %11 = vector.broadcast %10 : vector<1x200xf32> to vector<8x200xf32>
    %12 = arith.addf %9, %11 : vector<8x200xf32>
    %cst_11 = arith.constant 0.000000e+00 : f32
    %13 = vector.broadcast %cst_11 : f32 to vector<8x200xf32>
    %14 = arith.maximumf %12, %13 : vector<8x200xf32>
    %c0_12 = arith.constant 0 : index
    %c0_13 = arith.constant 0 : index
    %15 = vector.load %arg6[%c0_12, %c0_13] : memref<200x8xf32, #tpu.memory_space<vmem>>, vector<200x8xf32>
    %cst_14 = arith.constant dense<0.000000e+00> : vector<8x8xf32>
    %16 = tpu.matmul %14, %15, %cst_14 {dimension_numbers = #tpu.dot_dimension_numbers<[1], [0], [0], [1], [0, 0, 1, 1], [], []>} : vector<8x200xf32>, vector<200x8xf32>, vector<8x8xf32> -> vector<8x8xf32>
    %c0_15 = arith.constant 0 : index
    %c0_16 = arith.constant 0 : index
    %17 = vector.load %arg7[%c0_15, %c0_16] : memref<1x8xf32, #tpu.memory_space<vmem>>, vector<1x8xf32>
    %18 = vector.broadcast %17 : vector<1x8xf32> to vector<8x8xf32>
    %19 = arith.addf %16, %18 : vector<8x8xf32>
    %c0_17 = arith.constant 0 : index
    %c0_18 = arith.constant 0 : index
    %20 = vector.load %arg8[%c0_17, %c0_18] : memref<8x8xf32, #tpu.memory_space<vmem>>, vector<8x8xf32>
    tpu.vector_store %arg8[%c0_17, %c0_18], %19 {strides = array<i32>} : memref<8x8xf32, #tpu.memory_space<vmem>>, vector<8x8xf32>,
    return
  }
  func.func @transform_0(%arg0: i32) -> (i32, i32) {
    %c0_i32 = arith.constant 0 : i32
    %c0_i32_0 = arith.constant 0 : i32
    return %arg0, %c0_i32 : i32, i32
  }
  func.func @transform_1(%arg0: i32) -> (i32, i32) {
    %c0_i32 = arith.constant 0 : i32
    %c0_i32_0 = arith.constant 0 : i32
    %c0_i32_1 = arith.constant 0 : i32
    return %c0_i32, %c0_i32_0 : i32, i32
  }
  func.func @transform_2(%arg0: i32) -> (i32, i32) {
    %c0_i32 = arith.constant 0 : i32
    %c0_i32_0 = arith.constant 0 : i32
    %c0_i32_1 = arith.constant 0 : i32
    return %c0_i32, %c0_i32_0 : i32, i32
  }
  func.func @transform_3(%arg0: i32) -> (i32, i32) {
    %c0_i32 = arith.constant 0 : i32
    %c0_i32_0 = arith.constant 0 : i32
    %c0_i32_1 = arith.constant 0 : i32
    return %c0_i32, %c0_i32_0 : i32, i32
  }
  func.func @transform_4(%arg0: i32) -> (i32, i32) {
    %c0_i32 = arith.constant 0 : i32
    %c0_i32_0 = arith.constant 0 : i32
    %c0_i32_1 = arith.constant 0 : i32
    return %c0_i32, %c0_i32_0 : i32, i32
  }
  func.func @transform_5(%arg0: i32) -> (i32, i32) {
    %c0_i32 = arith.constant 0 : i32
    %c0_i32_0 = arith.constant 0 : i32
    %c0_i32_1 = arith.constant 0 : i32
    return %c0_i32, %c0_i32_0 : i32, i32
  }
  func.func @transform_6(%arg0: i32) -> (i32, i32) {
    %c0_i32 = arith.constant 0 : i32
    %c0_i32_0 = arith.constant 0 : i32
    %c0_i32_1 = arith.constant 0 : i32
    return %c0_i32, %c0_i32_0 : i32, i32
  }
  func.func @transform_7(%arg0: i32) -> (i32, i32) {
    %c0_i32 = arith.constant 0 : i32
    %c0_i32_0 = arith.constant 0 : i32
    return %arg0, %c0_i32 : i32, i32
  }
}

</mosaic_0001>

<llo_original>
// kernel: tpu_custom_call.1
$region0: #{tpu_custom_call.1}
  #allocation0 [shape = 'u32[]', space=smem, size = 0x4, offset = 0x4, fixed_abs, tag = 'smem constant byte address 0x4 - core index']
  #allocation1 [shape = 'u32[144,128]{1,0:T(1,128)}', space=vmem, size = 0x12000, scoped, tag = 'internal scratch']
  %s0 = inlined_call_operand.vmem [shape: f32[8,256], index: 0, kind: input, shape index: {}]
  %s1 = inlined_call_operand.vmem [shape: f32[256,400], index: 1, kind: input, shape index: {}]
  %s2 = inlined_call_operand.vmem [shape: f32[1,400], index: 2, kind: input, shape index: {}]
  %s3 = inlined_call_operand.vmem [shape: f32[400,200], index: 3, kind: input, shape index: {}]
  %s4 = inlined_call_operand.vmem [shape: f32[1,200], index: 4, kind: input, shape index: {}]
  %s5 = inlined_call_operand.vmem [shape: f32[200,8], index: 5, kind: input, shape index: {}]
  %s6 = inlined_call_operand.vmem [shape: f32[1,8], index: 6, kind: input, shape index: {}]
  %s7 = inlined_call_operand.hbm [shape: f32[8,8], index: 7, kind: output, shape index: {}]
  %s8 = sld [smem:[#allocation0]]
  $region38: #{tpu_custom_call.1} parent=0
    _
  %s10 = ssub.s32 1, %s8
  %s11 = scalar_select 0, %s10, %s8
  $region1: #{tpu_custom_call.1} parent=0
    #allocation2 [shape = 'u8[4096]{0}', space=vmem, size = 0x1000, scoped, tag = 'output window, operand 0, single buffered']
    #allocation3 [shape = 's32[1]{0}', space=sflag, size = 0x4, scoped, tag = 'scoped memory for tpu_custom_call.1']
    %12 = vsyncpa [#allocation3], 0
    // Predicated region
    $region2: #{tpu_custom_call.1} parent=1 // pred_check
      _
    $region3: #{tpu_custom_call.1} parent=1 // pred_check_branch
      %14 = sbr.rel (0) target = $region5
    $region4: #{tpu_custom_call.1} parent=1 // pred_region
      _
    $region5: #{tpu_custom_call.1} parent=1 // pred_fallthru
      _
    // Predicated region
    $region6: #{tpu_custom_call.1} parent=1 // pred_check
      _
    $region7: #{tpu_custom_call.1} parent=1 // pred_check_branch
      %16 = sbr.rel (0) target = $region9
    $region8: #{tpu_custom_call.1} parent=1 // pred_region
      _
    $region9: #{tpu_custom_call.1} parent=1 // pred_fallthru
      _
    // Predicated region
    $region10: #{tpu_custom_call.1} parent=1 // pred_check
      _
    $region11: #{tpu_custom_call.1} parent=1 // pred_check_branch
      %18 = sbr.rel (0) target = $region13
    $region12: #{tpu_custom_call.1} parent=1 // pred_region
      _
    $region13: #{tpu_custom_call.1} parent=1 // pred_fallthru
      _
    // Predicated region
    $region14: #{tpu_custom_call.1} parent=1 // pred_check
      _
    $region15: #{tpu_custom_call.1} parent=1 // pred_check_branch
      %20 = sbr.rel (0) target = $region17
    $region16: #{tpu_custom_call.1} parent=1 // pred_region
      _
    $region17: #{tpu_custom_call.1} parent=1 // pred_fallthru
      _
    // Predicated region
    $region18: #{tpu_custom_call.1} parent=1 // pred_check
      _
    $region19: #{tpu_custom_call.1} parent=1 // pred_check_branch
      %22 = sbr.rel (0) target = $region21
    $region20: #{tpu_custom_call.1} parent=1 // pred_region
      _
    $region21: #{tpu_custom_call.1} parent=1 // pred_fallthru
      _
    // Predicated region
    $region22: #{tpu_custom_call.1} parent=1 // pred_check
      _
    $region23: #{tpu_custom_call.1} parent=1 // pred_check_branch
      %24 = sbr.rel (0) target = $region25
    $region24: #{tpu_custom_call.1} parent=1 // pred_region
      _
    $region25: #{tpu_custom_call.1} parent=1 // pred_fallthru
      _
    // Predicated region
    $region26: #{tpu_custom_call.1} parent=1 // pred_check
      _
    $region27: #{tpu_custom_call.1} parent=1 // pred_check_branch
      %26 = sbr.rel (0) target = $region29
    $region28: #{tpu_custom_call.1} parent=1 // pred_region
      _
    $region29: #{tpu_custom_call.1} parent=1 // pred_fallthru
      _
    %v27 = vld [vmem:[%s0] sm:$0xff]
    %v28 = vld [vmem:[%s0 + $0x8] sm:$0xff]
    %v29 = vld [vmem:[%s1] sm:$0xff]
    %v30 = vld [vmem:[%s1 + $0x8] sm:$0xff]
    %v31 = vld [vmem:[%s1 + $0x10] sm:$0xff]
    %v32 = vld [vmem:[%s1 + $0x18] sm:$0xff]
    %v33 = vld [vmem:[%s1 + $0x20] sm:$0xff]
    %v34 = vld [vmem:[%s1 + $0x28] sm:$0xff]
    %v35 = vld [vmem:[%s1 + $0x30] sm:$0xff]
    %v36 = vld [vmem:[%s1 + $0x38] sm:$0xff]
    %v37 = vld [vmem:[%s1 + $0x40] sm:$0xff]
    %v38 = vld [vmem:[%s1 + $0x48] sm:$0xff]
    %v39 = vld [vmem:[%s1 + $0x50] sm:$0xff]
    %v40 = vld [vmem:[%s1 + $0x58] sm:$0xff]
    %v41 = vld [vmem:[%s1 + $0x60] sm:$0xff]
    %v42 = vld [vmem:[%s1 + $0x68] sm:$0xff]
    %v43 = vld [vmem:[%s1 + $0x70] sm:$0xff]
    %v44 = vld [vmem:[%s1 + $0x78] sm:$0xff]
    %v45 = vld [vmem:[%s1 + $0x80] sm:$0xff]
    %v46 = vld [vmem:[%s1 + $0x88] sm:$0xff]
    %v47 = vld [vmem:[%s1 + $0x90] sm:$0xff]
    %v48 = vld [vmem:[%s1 + $0x98] sm:$0xff]
    %v49 = vld [vmem:[%s1 + $0xa0] sm:$0xff]
    %v50 = vld [vmem:[%s1 + $0xa8] sm:$0xff]
    %v51 = vld [vmem:[%s1 + $0xb0] sm:$0xff]
    %v52 = vld [vmem:[%s1 + $0xb8] sm:$0xff]
    %v53 = vld [vmem:[%s1 + $0xc0] sm:$0xff]
    %v54 = vld [vmem:[%s1 + $0xc8] sm:$0xff]
    %v55 = vld [vmem:[%s1 + $0xd0] sm:$0xff]
    %v56 = vld [vmem:[%s1 + $0xd8] sm:$0xff]
    %v57 = vld [vmem:[%s1 + $0xe0] sm:$0xff]
    %v58 = vld [vmem:[%s1 + $0xe8] sm:$0xff]
    %v59 = vld [vmem:[%s1 + $0xf0] sm:$0xff]
    %v60 = vld [vmem:[%s1 + $0xf8] sm:$0xff]
    %v61 = vld [vmem:[%s1 + $0x100] sm:$0xff]
    %v62 = vld [vmem:[%s1 + $0x108] sm:$0xff]
    %v63 = vld [vmem:[%s1 + $0x110] sm:$0xff]
    %v64 = vld [vmem:[%s1 + $0x118] sm:$0xff]
    %v65 = vld [vmem:[%s1 + $0x120] sm:$0xff]
    %v66 = vld [vmem:[%s1 + $0x128] sm:$0xff]
    %v67 = vld [vmem:[%s1 + $0x130] sm:$0xff]
    %v68 = vld [vmem:[%s1 + $0x138] sm:$0xff]
    %v69 = vld [vmem:[%s1 + $0x140] sm:$0xff]
    %v70 = vld [vmem:[%s1 + $0x148] sm:$0xff]
    %v71 = vld [vmem:[%s1 + $0x150] sm:$0xff]
    %v72 = vld [vmem:[%s1 + $0x158] sm:$0xff]
    %v73 = vld [vmem:[%s1 + $0x160] sm:$0xff]
    %v74 = vld [vmem:[%s1 + $0x168] sm:$0xff]
    %v75 = vld [vmem:[%s1 + $0x170] sm:$0xff]
    %v76 = vld [vmem:[%s1 + $0x178] sm:$0xff]
    %v77 = vld [vmem:[%s1 + $0x180] sm:$0xff]
    %v78 = vld [vmem:[%s1 + $0x188] sm:$0xff]
    %v79 = vld [vmem:[%s1 + $0x190] sm:$0xff]
    %v80 = vld [vmem:[%s1 + $0x198] sm:$0xff]
    %v81 = vld [vmem:[%s1 + $0x1a0] sm:$0xff]
    %v82 = vld [vmem:[%s1 + $0x1a8] sm:$0xff]
    %v83 = vld [vmem:[%s1 + $0x1b0] sm:$0xff]
    %v84 = vld [vmem:[%s1 + $0x1b8] sm:$0xff]
    %v85 = vld [vmem:[%s1 + $0x1c0] sm:$0xff]
    %v86 = vld [vmem:[%s1 + $0x1c8] sm:$0xff]
    %v87 = vld [vmem:[%s1 + $0x1d0] sm:$0xff]
    %v88 = vld [vmem:[%s1 + $0x1d8] sm:$0xff]
    %v89 = vld [vmem:[%s1 + $0x1e0] sm:$0xff]
    %v90 = vld [vmem:[%s1 + $0x1e8] sm:$0xff]
    %v91 = vld [vmem:[%s1 + $0x1f0] sm:$0xff]
    %v92 = vld [vmem:[%s1 + $0x1f8] sm:$0xff]
    %v93 = vld [vmem:[%s1 + $0x200] sm:$0xff]
    %v94 = vld [vmem:[%s1 + $0x208] sm:$0xff]
    %v95 = vld [vmem:[%s1 + $0x210] sm:$0xff]
    %v96 = vld [vmem:[%s1 + $0x218] sm:$0xff]
    %v97 = vld [vmem:[%s1 + $0x220] sm:$0xff]
    %v98 = vld [vmem:[%s1 + $0x228] sm:$0xff]
    %v99 = vld [vmem:[%s1 + $0x230] sm:$0xff]
    %v100 = vld [vmem:[%s1 + $0x238] sm:$0xff]
    %v101 = vld [vmem:[%s1 + $0x240] sm:$0xff]
    %v102 = vld [vmem:[%s1 + $0x248] sm:$0xff]
    %v103 = vld [vmem:[%s1 + $0x250] sm:$0xff]
    %v104 = vld [vmem:[%s1 + $0x258] sm:$0xff]
    %v105 = vld [vmem:[%s1 + $0x260] sm:$0xff]
    %v106 = vld [vmem:[%s1 + $0x268] sm:$0xff]
    %v107 = vld [vmem:[%s1 + $0x270] sm:$0xff]
    %v108 = vld [vmem:[%s1 + $0x278] sm:$0xff]
    %v109 = vld [vmem:[%s1 + $0x280] sm:$0xff]
    %v110 = vld [vmem:[%s1 + $0x288] sm:$0xff]
    %v111 = vld [vmem:[%s1 + $0x290] sm:$0xff]
    %v112 = vld [vmem:[%s1 + $0x298] sm:$0xff]
    %v113 = vld [vmem:[%s1 + $0x2a0] sm:$0xff]
    %v114 = vld [vmem:[%s1 + $0x2a8] sm:$0xff]
    %v115 = vld [vmem:[%s1 + $0x2b0] sm:$0xff]
    %v116 = vld [vmem:[%s1 + $0x2b8] sm:$0xff]
    %v117 = vld [vmem:[%s1 + $0x2c0] sm:$0xff]
    %v118 = vld [vmem:[%s1 + $0x2c8] sm:$0xff]
    %v119 = vld [vmem:[%s1 + $0x2d0] sm:$0xff]
    %v120 = vld [vmem:[%s1 + $0x2d8] sm:$0xff]
    %v121 = vld [vmem:[%s1 + $0x2e0] sm:$0xff]
    %v122 = vld [vmem:[%s1 + $0x2e8] sm:$0xff]
    %v123 = vld [vmem:[%s1 + $0x2f0] sm:$0xff]
    %v124 = vld [vmem:[%s1 + $0x2f8] sm:$0xff]
    %v125 = vld [vmem:[%s1 + $0x300] sm:$0xff]
    %v126 = vld [vmem:[%s1 + $0x308] sm:$0xff]
    %v127 = vld [vmem:[%s1 + $0x310] sm:$0xff]
    %v128 = vld [vmem:[%s1 + $0x318] sm:$0xff]
    %v129 = vld [vmem:[%s1 + $0x320] sm:$0xff]
    %v130 = vld [vmem:[%s1 + $0x328] sm:$0xff]
    %v131 = vld [vmem:[%s1 + $0x330] sm:$0xff]
    %v132 = vld [vmem:[%s1 + $0x338] sm:$0xff]
    %v133 = vld [vmem:[%s1 + $0x340] sm:$0xff]
    %v134 = vld [vmem:[%s1 + $0x348] sm:$0xff]
    %v135 = vld [vmem:[%s1 + $0x350] sm:$0xff]
    %v136 = vld [vmem:[%s1 + $0x358] sm:$0xff]
    %v137 = vld [vmem:[%s1 + $0x360] sm:$0xff]
    %v138 = vld [vmem:[%s1 + $0x368] sm:$0xff]
    %v139 = vld [vmem:[%s1 + $0x370] sm:$0xff]
    %v140 = vld [vmem:[%s1 + $0x378] sm:$0xff]
    %v141 = vld [vmem:[%s1 + $0x380] sm:$0xff]
    %v142 = vld [vmem:[%s1 + $0x388] sm:$0xff]
    %v143 = vld [vmem:[%s1 + $0x390] sm:$0xff]
    %v144 = vld [vmem:[%s1 + $0x398] sm:$0xff]
    %v145 = vld [vmem:[%s1 + $0x3a0] sm:$0xff]
    %v146 = vld [vmem:[%s1 + $0x3a8] sm:$0xff]
    %v147 = vld [vmem:[%s1 + $0x3b0] sm:$0xff]
    %v148 = vld [vmem:[%s1 + $0x3b8] sm:$0xff]
    %v149 = vld [vmem:[%s1 + $0x3c0] sm:$0xff]
    %v150 = vld [vmem:[%s1 + $0x3c8] sm:$0xff]
    %v151 = vld [vmem:[%s1 + $0x3d0] sm:$0xff]
    %v152 = vld [vmem:[%s1 + $0x3d8] sm:$0xff]
    %v153 = vld [vmem:[%s1 + $0x3e0] sm:$0xff]
    %v154 = vld [vmem:[%s1 + $0x3e8] sm:$0xff]
    %v155 = vld [vmem:[%s1 + $0x3f0] sm:$0xff]
    %v156 = vld [vmem:[%s1 + $0x3f8] sm:$0xff]
    %v157 = vld [vmem:[%s2] sm:$0xf]
    %v159 = vlaneseq
    %v160 = vshrl.u32 %v159, 7
    %v161 = vsub.s32 0, %v160
    %v162 = vrot.slane %v157, %v161
    %v163 = vlaneseq
    %v164 = vshrl.u32 %v163, 7
    %v165 = vsub.s32 1, %v164
    %v166 = vrot.slane %v157, %v165
    %v167 = vlaneseq
    %v168 = vshrl.u32 %v167, 7
    %v169 = vsub.s32 2, %v168
    %v170 = vrot.slane %v157, %v169
    %v171 = vlaneseq
    %v172 = vshrl.u32 %v171, 7
    %v173 = vsub.s32 3, %v172
    %v174 = vrot.slane %v157, %v173
    %179 = vmatprep.subr.mxu0 %v90
    %180 = vmatpush1.msra.mxu0 %v89
    %181 = vmatprep.subr.mxu0 %v86
    %182 = vmatpush1.msra.mxu0 %v85
    %183 = vmatprep.subr.mxu0 %v82
    %184 = vmatpush1.msra.mxu0 %v81
    %185 = vmatprep.subr.mxu0 %v78
    %186 = vmatpush1.msra.mxu0 %v77
    %187 = vmatprep.subr.mxu0 %v74
    %188 = vmatpush1.msra.mxu0 %v73
    %189 = vmatprep.subr.mxu0 %v70
    %190 = vmatpush1.msra.mxu0 %v69
    %191 = vmatprep.subr.mxu0 %v66
    %192 = vmatpush1.msra.mxu0 %v65
    %193 = vmatprep.subr.mxu0 %v62
    %194 = vmatpush1.msra.mxu0 %v61
    %195 = vmatprep.subr.mxu0 %v58
    %196 = vmatpush1.msra.mxu0 %v57
    %197 = vmatprep.subr.mxu0 %v54
    %198 = vmatpush1.msra.mxu0 %v53
    %199 = vmatprep.subr.mxu0 %v50
    %200 = vmatpush1.msra.mxu0 %v49
    %201 = vmatprep.subr.mxu0 %v46
    %202 = vmatpush1.msra.mxu0 %v45
    %203 = vmatprep.subr.mxu0 %v42
    %204 = vmatpush1.msra.mxu0 %v41
    %205 = vmatprep.subr.mxu0 %v38
    %206 = vmatpush1.msra.mxu0 %v37
    %207 = vmatprep.subr.mxu0 %v34
    %208 = vmatpush1.msra.mxu0 %v33
    %209 = vmatprep.subr.mxu0 %v30
    %210 = vmatpush1.msra.mxu0 %v29
    %211 = vmatprep.subr.mxu0 %v154
    %212 = vmatpush2.msra.mxu0 %v153
    %213 = vmatprep.subr.mxu0 %v150
    %214 = vmatpush2.msra.mxu0 %v149
    %215 = vmatprep.subr.mxu0 %v146
    %216 = vmatpush2.msra.mxu0 %v145
    %217 = vmatprep.subr.mxu0 %v142
    %218 = vmatpush2.msra.mxu0 %v141
    %219 = vmatprep.subr.mxu0 %v138
    %220 = vmatpush2.msra.mxu0 %v137
    %221 = vmatprep.subr.mxu0 %v134
    %222 = vmatpush2.msra.mxu0 %v133
    %223 = vmatprep.subr.mxu0 %v130
    %224 = vmatpush2.msra.mxu0 %v129
    %225 = vmatprep.subr.mxu0 %v126
    %226 = vmatpush2.msra.mxu0 %v125
    %227 = vmatprep.subr.mxu0 %v122
    %228 = vmatpush2.msra.mxu0 %v121
    %229 = vmatprep.subr.mxu0 %v118
    %230 = vmatpush2.msra.mxu0 %v117
    %231 = vmatprep.subr.mxu0 %v114
    %232 = vmatpush2.msra.mxu0 %v113
    %233 = vmatprep.subr.mxu0 %v110
    %234 = vmatpush2.msra.mxu0 %v109
    %235 = vmatprep.subr.mxu0 %v106
    %236 = vmatpush2.msra.mxu0 %v105
    %237 = vmatprep.subr.mxu0 %v102
    %238 = vmatpush2.msra.mxu0 %v101
    %239 = vmatprep.subr.mxu0 %v98
    %240 = vmatpush2.msra.mxu0 %v97
    %241 = vmatprep.subr.mxu0 %v94
    %242 = vmatpush2.msra.mxu0 %v93
    %243 = vmatprep.mubr.f32.mxu0 %v28
    %244 = vmatmul.mubr.f32.gmra.mxu0 %v27
    %v245 = vpop.f32.mrf.mxu0
    %v246 = vadd.f32 %v162, %v245
    %v247 = vpop.f32.mrf.mxu0
    %v248 = vadd.f32 %v166, %v247
    %249 = vdwg.mxu0
    %250 = vmatprep.subr.mxu0 %v92
    %251 = vmatpush1.msra.mxu0 %v91
    %252 = vmatprep.subr.mxu0 %v88
    %253 = vmatpush1.msra.mxu0 %v87
    %254 = vmatprep.subr.mxu0 %v84
    %255 = vmatpush1.msra.mxu0 %v83
    %256 = vmatprep.subr.mxu0 %v80
    %257 = vmatpush1.msra.mxu0 %v79
    %258 = vmatprep.subr.mxu0 %v76
    %259 = vmatpush1.msra.mxu0 %v75
    %260 = vmatprep.subr.mxu0 %v72
    %261 = vmatpush1.msra.mxu0 %v71
    %262 = vmatprep.subr.mxu0 %v68
    %263 = vmatpush1.msra.mxu0 %v67
    %264 = vmatprep.subr.mxu0 %v64
    %265 = vmatpush1.msra.mxu0 %v63
    %266 = vmatprep.subr.mxu0 %v60
    %267 = vmatpush1.msra.mxu0 %v59
    %268 = vmatprep.subr.mxu0 %v56
    %269 = vmatpush1.msra.mxu0 %v55
    %270 = vmatprep.subr.mxu0 %v52
    %271 = vmatpush1.msra.mxu0 %v51
    %272 = vmatprep.subr.mxu0 %v48
    %273 = vmatpush1.msra.mxu0 %v47
    %274 = vmatprep.subr.mxu0 %v44
    %275 = vmatpush1.msra.mxu0 %v43
    %276 = vmatprep.subr.mxu0 %v40
    %277 = vmatpush1.msra.mxu0 %v39
    %278 = vmatprep.subr.mxu0 %v36
    %279 = vmatpush1.msra.mxu0 %v35
    %280 = vmatprep.subr.mxu0 %v32
    %281 = vmatpush1.msra.mxu0 %v31
    %282 = vmatprep.subr.mxu0 %v156
    %283 = vmatpush2.msra.mxu0 %v155
    %284 = vmatprep.subr.mxu0 %v152
    %285 = vmatpush2.msra.mxu0 %v151
    %286 = vmatprep.subr.mxu0 %v148
    %287 = vmatpush2.msra.mxu0 %v147
    %288 = vmatprep.subr.mxu0 %v144
    %289 = vmatpush2.msra.mxu0 %v143
    %290 = vmatprep.subr.mxu0 %v140
    %291 = vmatpush2.msra.mxu0 %v139
    %292 = vmatprep.subr.mxu0 %v136
    %293 = vmatpush2.msra.mxu0 %v135
    %294 = vmatprep.subr.mxu0 %v132
    %295 = vmatpush2.msra.mxu0 %v131
    %296 = vmatprep.subr.mxu0 %v128
    %297 = vmatpush2.msra.mxu0 %v127
    %298 = vmatprep.subr.mxu0 %v124
    %299 = vmatpush2.msra.mxu0 %v123
    %300 = vmatprep.subr.mxu0 %v120
    %301 = vmatpush2.msra.mxu0 %v119
    %302 = vmatprep.subr.mxu0 %v116
    %303 = vmatpush2.msra.mxu0 %v115
    %304 = vmatprep.subr.mxu0 %v112
    %305 = vmatpush2.msra.mxu0 %v111
    %306 = vmatprep.subr.mxu0 %v108
    %307 = vmatpush2.msra.mxu0 %v107
    %308 = vmatprep.subr.mxu0 %v104
    %309 = vmatpush2.msra.mxu0 %v103
    %310 = vmatprep.subr.mxu0 %v100
    %311 = vmatpush2.msra.mxu0 %v99
    %312 = vmatprep.subr.mxu0 %v96
    %313 = vmatpush2.msra.mxu0 %v95
    %314 = vmatprep.mubr.f32.mxu0 %v28
    %315 = vmatmul.mubr.f32.gmra.mxu0 %v27
    %v316 = vpop.f32.mrf.mxu0
    %v317 = vadd.f32 %v170, %v316
    %v318 = vpop.f32.mrf.mxu0
    %v319 = vadd.f32 %v174, %v318
    %320 = vdwg.mxu0
    %v321 = vmax.f32 %v246, 0.0
    %v322 = vmax.f32 %v248, 0.0
    %v323 = vmax.f32 %v317, 0.0
    %v324 = vmax.f32 %v319, 0.0
    %v325 = vld [vmem:[%s3] sm:$0xff]
    %v326 = vld [vmem:[%s3 + $0x8] sm:$0xff]
    %v327 = vld [vmem:[%s3 + $0x10] sm:$0xff]
    %v328 = vld [vmem:[%s3 + $0x18] sm:$0xff]
    %v329 = vld [vmem:[%s3 + $0x20] sm:$0xff]
    %v330 = vld [vmem:[%s3 + $0x28] sm:$0xff]
    %v331 = vld [vmem:[%s3 + $0x30] sm:$0xff]
    %v332 = vld [vmem:[%s3 + $0x38] sm:$0xff]
    %v333 = vld [vmem:[%s3 + $0x40] sm:$0xff]
    %v334 = vld [vmem:[%s3 + $0x48] sm:$0xff]
    %v335 = vld [vmem:[%s3 + $0x50] sm:$0xff]
    %v336 = vld [vmem:[%s3 + $0x58] sm:$0xff]
    %v337 = vld [vmem:[%s3 + $0x60] sm:$0xff]
    %v338 = vld [vmem:[%s3 + $0x68] sm:$0xff]
    %v339 = vld [vmem:[%s3 + $0x70] sm:$0xff]
    %v340 = vld [vmem:[%s3 + $0x78] sm:$0xff]
    %v341 = vld [vmem:[%s3 + $0x80] sm:$0xff]
    %v342 = vld [vmem:[%s3 + $0x88] sm:$0xff]
    %v343 = vld [vmem:[%s3 + $0x90] sm:$0xff]
    %v344 = vld [vmem:[%s3 + $0x98] sm:$0xff]
    %v345 = vld [vmem:[%s3 + $0xa0] sm:$0xff]
    %v346 = vld [vmem:[%s3 + $0xa8] sm:$0xff]
    %v347 = vld [vmem:[%s3 + $0xb0] sm:$0xff]
    %v348 = vld [vmem:[%s3 + $0xb8] sm:$0xff]
    %v349 = vld [vmem:[%s3 + $0xc0] sm:$0xff]
    %v350 = vld [vmem:[%s3 + $0xc8] sm:$0xff]
    %v351 = vld [vmem:[%s3 + $0xd0] sm:$0xff]
    %v352 = vld [vmem:[%s3 + $0xd8] sm:$0xff]
    %v353 = vld [vmem:[%s3 + $0xe0] sm:$0xff]
    %v354 = vld [vmem:[%s3 + $0xe8] sm:$0xff]
    %v355 = vld [vmem:[%s3 + $0xf0] sm:$0xff]
    %v356 = vld [vmem:[%s3 + $0xf8] sm:$0xff]
    %v357 = vld [vmem:[%s3 + $0x100] sm:$0xff]
    %v358 = vld [vmem:[%s3 + $0x108] sm:$0xff]
    %v359 = vld [vmem:[%s3 + $0x110] sm:$0xff]
    %v360 = vld [vmem:[%s3 + $0x118] sm:$0xff]
    %v361 = vld [vmem:[%s3 + $0x120] sm:$0xff]
    %v362 = vld [vmem:[%s3 + $0x128] sm:$0xff]
    %v363 = vld [vmem:[%s3 + $0x130] sm:$0xff]
    %v364 = vld [vmem:[%s3 + $0x138] sm:$0xff]
    %v365 = vld [vmem:[%s3 + $0x140] sm:$0xff]
    %v366 = vld [vmem:[%s3 + $0x148] sm:$0xff]
    %v367 = vld [vmem:[%s3 + $0x150] sm:$0xff]
    %v368 = vld [vmem:[%s3 + $0x158] sm:$0xff]
    %v369 = vld [vmem:[%s3 + $0x160] sm:$0xff]
    %v370 = vld [vmem:[%s3 + $0x168] sm:$0xff]
    %v371 = vld [vmem:[%s3 + $0x170] sm:$0xff]
    %v372 = vld [vmem:[%s3 + $0x178] sm:$0xff]
    %v373 = vld [vmem:[%s3 + $0x180] sm:$0xff]
    %v374 = vld [vmem:[%s3 + $0x188] sm:$0xff]
    %v375 = vld [vmem:[%s3 + $0x190] sm:$0xff]
    %v376 = vld [vmem:[%s3 + $0x198] sm:$0xff]
    %v377 = vld [vmem:[%s3 + $0x1a0] sm:$0xff]
    %v378 = vld [vmem:[%s3 + $0x1a8] sm:$0xff]
    %v379 = vld [vmem:[%s3 + $0x1b0] sm:$0xff]
    %v380 = vld [vmem:[%s3 + $0x1b8] sm:$0xff]
    %v381 = vld [vmem:[%s3 + $0x1c0] sm:$0xff]
    %v382 = vld [vmem:[%s3 + $0x1c8] sm:$0xff]
    %v383 = vld [vmem:[%s3 + $0x1d0] sm:$0xff]
    %v384 = vld [vmem:[%s3 + $0x1d8] sm:$0xff]
    %v385 = vld [vmem:[%s3 + $0x1e0] sm:$0xff]
    %v386 = vld [vmem:[%s3 + $0x1e8] sm:$0xff]
    %v387 = vld [vmem:[%s3 + $0x1f0] sm:$0xff]
    %v388 = vld [vmem:[%s3 + $0x1f8] sm:$0xff]
    %v389 = vld [vmem:[%s3 + $0x200] sm:$0xff]
    %v390 = vld [vmem:[%s3 + $0x208] sm:$0xff]
    %v391 = vld [vmem:[%s3 + $0x210] sm:$0xff]
    %v392 = vld [vmem:[%s3 + $0x218] sm:$0xff]
    %v393 = vld [vmem:[%s3 + $0x220] sm:$0xff]
    %v394 = vld [vmem:[%s3 + $0x228] sm:$0xff]
    %v395 = vld [vmem:[%s3 + $0x230] sm:$0xff]
    %v396 = vld [vmem:[%s3 + $0x238] sm:$0xff]
    %v397 = vld [vmem:[%s3 + $0x240] sm:$0xff]
    %v398 = vld [vmem:[%s3 + $0x248] sm:$0xff]
    %v399 = vld [vmem:[%s3 + $0x250] sm:$0xff]
    %v400 = vld [vmem:[%s3 + $0x258] sm:$0xff]
    %v401 = vld [vmem:[%s3 + $0x260] sm:$0xff]
    %v402 = vld [vmem:[%s3 + $0x268] sm:$0xff]
    %v403 = vld [vmem:[%s3 + $0x270] sm:$0xff]
    %v404 = vld [vmem:[%s3 + $0x278] sm:$0xff]
    %v405 = vld [vmem:[%s3 + $0x280] sm:$0xff]
    %v406 = vld [vmem:[%s3 + $0x288] sm:$0xff]
    %v407 = vld [vmem:[%s3 + $0x290] sm:$0xff]
    %v408 = vld [vmem:[%s3 + $0x298] sm:$0xff]
    %v409 = vld [vmem:[%s3 + $0x2a0] sm:$0xff]
    %v410 = vld [vmem:[%s3 + $0x2a8] sm:$0xff]
    %v411 = vld [vmem:[%s3 + $0x2b0] sm:$0xff]
    %v412 = vld [vmem:[%s3 + $0x2b8] sm:$0xff]
    %v413 = vld [vmem:[%s3 + $0x2c0] sm:$0xff]
    %v414 = vld [vmem:[%s3 + $0x2c8] sm:$0xff]
    %v415 = vld [vmem:[%s3 + $0x2d0] sm:$0xff]
    %v416 = vld [vmem:[%s3 + $0x2d8] sm:$0xff]
    %v417 = vld [vmem:[%s3 + $0x2e0] sm:$0xff]
    %v418 = vld [vmem:[%s3 + $0x2e8] sm:$0xff]
    %v419 = vld [vmem:[%s3 + $0x2f0] sm:$0xff]
    %v420 = vld [vmem:[%s3 + $0x2f8] sm:$0xff]
    %v421 = vld [vmem:[%s3 + $0x300] sm:$0xff]
    %v422 = vld [vmem:[%s3 + $0x308] sm:$0xff]
    %v423 = vld [vmem:[%s3 + $0x310] sm:$0xff]
    %v424 = vld [vmem:[%s3 + $0x318] sm:$0xff]
    %v425 = vld [vmem:[%s4] sm:$0x3]
    %v427 = vlaneseq
    %v428 = vshrl.u32 %v427, 7
    %v429 = vsub.s32 0, %v428
    %v430 = vrot.slane %v425, %v429
    %v431 = vlaneseq
    %v432 = vshrl.u32 %v431, 7
    %v433 = vsub.s32 1, %v432
    %v434 = vrot.slane %v425, %v433
    %vm437 = vcmask 130048
    %v439 = vsel %vm437, %v324, 0
    %441 = vmatprep.subr.mxu0 %v356
    %442 = vmatpush1.msra.mxu0 %v355
    %443 = vmatprep.subr.mxu0 %v354
    %444 = vmatpush1.msra.mxu0 %v353
    %445 = vmatprep.subr.mxu0 %v352
    %446 = vmatpush1.msra.mxu0 %v351
    %447 = vmatprep.subr.mxu0 %v350
    %448 = vmatpush1.msra.mxu0 %v349
    %449 = vmatprep.subr.mxu0 %v348
    %450 = vmatpush1.msra.mxu0 %v347
    %451 = vmatprep.subr.mxu0 %v346
    %452 = vmatpush1.msra.mxu0 %v345
    %453 = vmatprep.subr.mxu0 %v344
    %454 = vmatpush1.msra.mxu0 %v343
    %455 = vmatprep.subr.mxu0 %v342
    %456 = vmatpush1.msra.mxu0 %v341
    %457 = vmatprep.subr.mxu0 %v340
    %458 = vmatpush1.msra.mxu0 %v339
    %459 = vmatprep.subr.mxu0 %v338
    %460 = vmatpush1.msra.mxu0 %v337
    %461 = vmatprep.subr.mxu0 %v336
    %462 = vmatpush1.msra.mxu0 %v335
    %463 = vmatprep.subr.mxu0 %v334
    %464 = vmatpush1.msra.mxu0 %v333
    %465 = vmatprep.subr.mxu0 %v332
    %466 = vmatpush1.msra.mxu0 %v331
    %467 = vmatprep.subr.mxu0 %v330
    %468 = vmatpush1.msra.mxu0 %v329
    %469 = vmatprep.subr.mxu0 %v328
    %470 = vmatpush1.msra.mxu0 %v327
    %471 = vmatprep.subr.mxu0 %v326
    %472 = vmatpush1.msra.mxu0 %v325
    %473 = vmatprep.subr.mxu0 %v388
    %474 = vmatpush2.msra.mxu0 %v387
    %475 = vmatprep.subr.mxu0 %v386
    %476 = vmatpush2.msra.mxu0 %v385
    %477 = vmatprep.subr.mxu0 %v384
    %478 = vmatpush2.msra.mxu0 %v383
    %479 = vmatprep.subr.mxu0 %v382
    %480 = vmatpush2.msra.mxu0 %v381
    %481 = vmatprep.subr.mxu0 %v380
    %482 = vmatpush2.msra.mxu0 %v379
    %483 = vmatprep.subr.mxu0 %v378
    %484 = vmatpush2.msra.mxu0 %v377
    %485 = vmatprep.subr.mxu0 %v376
    %486 = vmatpush2.msra.mxu0 %v375
    %487 = vmatprep.subr.mxu0 %v374
    %488 = vmatpush2.msra.mxu0 %v373
    %489 = vmatprep.subr.mxu0 %v372
    %490 = vmatpush2.msra.mxu0 %v371
    %491 = vmatprep.subr.mxu0 %v370
    %492 = vmatpush2.msra.mxu0 %v369
    %493 = vmatprep.subr.mxu0 %v368
    %494 = vmatpush2.msra.mxu0 %v367
    %495 = vmatprep.subr.mxu0 %v366
    %496 = vmatpush2.msra.mxu0 %v365
    %497 = vmatprep.subr.mxu0 %v364
    %498 = vmatpush2.msra.mxu0 %v363
    %499 = vmatprep.subr.mxu0 %v362
    %500 = vmatpush2.msra.mxu0 %v361
    %501 = vmatprep.subr.mxu0 %v360
    %502 = vmatpush2.msra.mxu0 %v359
    %503 = vmatprep.subr.mxu0 %v358
    %504 = vmatpush2.msra.mxu0 %v357
    %505 = vmatprep.mubr.f32.mxu0 %v322
    %506 = vmatmul.mubr.f32.gmra.mxu0 %v321
    %v507 = vpop.f32.mrf.mxu0
    %v508 = vadd.f32 %v430, %v507
    %v509 = vpop.f32.mrf.mxu0
    %v510 = vadd.f32 %v434, %v509
    %511 = vdwg.mxu0
    %512 = vmatprep.subr.mxu0 %v420
    %513 = vmatpush1.msra.mxu0 %v419
    %514 = vmatprep.subr.mxu0 %v418
    %515 = vmatpush1.msra.mxu0 %v417
    %516 = vmatprep.subr.mxu0 %v416
    %517 = vmatpush1.msra.mxu0 %v415
    %518 = vmatprep.subr.mxu0 %v414
    %519 = vmatpush1.msra.mxu0 %v413
    %520 = vmatprep.subr.mxu0 %v412
    %521 = vmatpush1.msra.mxu0 %v411
    %522 = vmatprep.subr.mxu0 %v410
    %523 = vmatpush1.msra.mxu0 %v409
    %524 = vmatprep.subr.mxu0 %v408
    %525 = vmatpush1.msra.mxu0 %v407
    %526 = vmatprep.subr.mxu0 %v406
    %527 = vmatpush1.msra.mxu0 %v405
    %528 = vmatprep.subr.mxu0 %v404
    %529 = vmatpush1.msra.mxu0 %v403
    %530 = vmatprep.subr.mxu0 %v402
    %531 = vmatpush1.msra.mxu0 %v401
    %532 = vmatprep.subr.mxu0 %v400
    %533 = vmatpush1.msra.mxu0 %v399
    %534 = vmatprep.subr.mxu0 %v398
    %535 = vmatpush1.msra.mxu0 %v397
    %536 = vmatprep.subr.mxu0 %v396
    %537 = vmatpush1.msra.mxu0 %v395
    %538 = vmatprep.subr.mxu0 %v394
    %539 = vmatpush1.msra.mxu0 %v393
    %540 = vmatprep.subr.mxu0 %v392
    %541 = vmatpush1.msra.mxu0 %v391
    %542 = vmatprep.subr.mxu0 %v390
    %543 = vmatpush1.msra.mxu0 %v389
    %544 = vmatprep.subr.mxu0 0.0
    %545 = vmatpush2.msra.mxu0 0.0
    %546 = vmatprep.subr.mxu0 0.0
    %547 = vmatpush2.msra.mxu0 0.0
    %548 = vmatprep.subr.mxu0 0.0
    %549 = vmatpush2.msra.mxu0 0.0
    %550 = vmatprep.subr.mxu0 0.0
    %551 = vmatpush2.msra.mxu0 0.0
    %552 = vmatprep.subr.mxu0 0.0
    %553 = vmatpush2.msra.mxu0 0.0
    %554 = vmatprep.subr.mxu0 0.0
    %555 = vmatpush2.msra.mxu0 0.0
    %556 = vmatprep.subr.mxu0 0.0
    %557 = vmatpush2.msra.mxu0 0.0
    %558 = vmatprep.subr.mxu0 0.0
    %559 = vmatpush2.msra.mxu0 0.0
    %560 = vmatprep.subr.mxu0 0.0
    %561 = vmatpush2.msra.mxu0 0.0
    %562 = vmatprep.subr.mxu0 0.0
    %563 = vmatpush2.msra.mxu0 0.0
    %564 = vmatprep.subr.mxu0 0.0
    %565 = vmatpush2.msra.mxu0 0.0
    %566 = vmatprep.subr.mxu0 0.0
    %567 = vmatpush2.msra.mxu0 0.0
    %568 = vmatprep.subr.mxu0 0.0
    %569 = vmatpush2.msra.mxu0 0.0
    %570 = vmatprep.subr.mxu0 0.0
    %571 = vmatpush2.msra.mxu0 0.0
    %572 = vmatprep.subr.mxu0 %v424
    %573 = vmatpush2.msra.mxu0 %v423
    %574 = vmatprep.subr.mxu0 %v422
    %575 = vmatpush2.msra.mxu0 %v421
    %576 = vmatprep.mubr.f32.mxu0 %v439
    %577 = vmatmul.mubr.f32.gmra.mxu0 %v323
    %v578 = vpop.f32.mrf.mxu0
    %v579 = vadd.f32 %v508, %v578
    %v580 = vpop.f32.mrf.mxu0
    %v581 = vadd.f32 %v510, %v580
    %582 = vdwg.mxu0
    %v583 = vmax.f32 %v579, 0.0
    %v584 = vmax.f32 %v581, 0.0
    %v585 = vld [vmem:[%s5] sm:$0xff]
    %v586 = vld [vmem:[%s5 + $0x8] sm:$0xff]
    %v587 = vld [vmem:[%s5 + $0x10] sm:$0xff]
    %v588 = vld [vmem:[%s5 + $0x18] sm:$0xff]
    %v589 = vld [vmem:[%s5 + $0x20] sm:$0xff]
    %v590 = vld [vmem:[%s5 + $0x28] sm:$0xff]
    %v591 = vld [vmem:[%s5 + $0x30] sm:$0xff]
    %v592 = vld [vmem:[%s5 + $0x38] sm:$0xff]
    %v593 = vld [vmem:[%s5 + $0x40] sm:$0xff]
    %v594 = vld [vmem:[%s5 + $0x48] sm:$0xff]
    %v595 = vld [vmem:[%s5 + $0x50] sm:$0xff]
    %v596 = vld [vmem:[%s5 + $0x58] sm:$0xff]
    %v597 = vld [vmem:[%s5 + $0x60] sm:$0xff]
    %v598 = vld [vmem:[%s5 + $0x68] sm:$0xff]
    %v599 = vld [vmem:[%s5 + $0x70] sm:$0xff]
    %v600 = vld [vmem:[%s5 + $0x78] sm:$0xff]
    %v601 = vld [vmem:[%s5 + $0x80] sm:$0xff]
    %v602 = vld [vmem:[%s5 + $0x88] sm:$0xff]
    %v603 = vld [vmem:[%s5 + $0x90] sm:$0xff]
    %v604 = vld [vmem:[%s5 + $0x98] sm:$0xff]
    %v605 = vld [vmem:[%s5 + $0xa0] sm:$0xff]
    %v606 = vld [vmem:[%s5 + $0xa8] sm:$0xff]
    %v607 = vld [vmem:[%s5 + $0xb0] sm:$0xff]
    %v608 = vld [vmem:[%s5 + $0xb8] sm:$0xff]
    %v609 = vld [vmem:[%s5 + $0xc0] sm:$0xff]
    %v610 = vld [vmem:[%s6] sm:$0x1]
    %v612 = vlaneseq
    %v613 = vshrl.u32 %v612, 7
    %v614 = vsub.s32 0, %v613
    %v615 = vrot.slane %v610, %v614
    %vm617 = vcmask 588800
    %v619 = vsel %vm617, %v584, 0
    %621 = vmatprep.subr.mxu0 0.0
    %622 = vmatpush1.msra.mxu0 %v600
    %623 = vmatprep.subr.mxu0 0.0
    %624 = vmatpush1.msra.mxu0 %v599
    %625 = vmatprep.subr.mxu0 0.0
    %626 = vmatpush1.msra.mxu0 %v598
    %627 = vmatprep.subr.mxu0 0.0
    %628 = vmatpush1.msra.mxu0 %v597
    %629 = vmatprep.subr.mxu0 0.0
    %630 = vmatpush1.msra.mxu0 %v596
    %631 = vmatprep.subr.mxu0 0.0
    %632 = vmatpush1.msra.mxu0 %v595
    %633 = vmatprep.subr.mxu0 0.0
    %634 = vmatpush1.msra.mxu0 %v594
    %635 = vmatprep.subr.mxu0 0.0
    %636 = vmatpush1.msra.mxu0 %v593
    %637 = vmatprep.subr.mxu0 0.0
    %638 = vmatpush1.msra.mxu0 %v592
    %639 = vmatprep.subr.mxu0 0.0
    %640 = vmatpush1.msra.mxu0 %v591
    %641 = vmatprep.subr.mxu0 0.0
    %642 = vmatpush1.msra.mxu0 %v590
    %643 = vmatprep.subr.mxu0 0.0
    %644 = vmatpush1.msra.mxu0 %v589
    %645 = vmatprep.subr.mxu0 0.0
    %646 = vmatpush1.msra.mxu0 %v588
    %647 = vmatprep.subr.mxu0 0.0
    %648 = vmatpush1.msra.mxu0 %v587
    %649 = vmatprep.subr.mxu0 0.0
    %650 = vmatpush1.msra.mxu0 %v586
    %651 = vmatprep.subr.mxu0 0.0
    %652 = vmatpush1.msra.mxu0 %v585
    %653 = vmatprep.subr.mxu0 0.0
    %654 = vmatpush2.msra.mxu0 0.0
    %655 = vmatprep.subr.mxu0 0.0
    %656 = vmatpush2.msra.mxu0 0.0
    %657 = vmatprep.subr.mxu0 0.0
    %658 = vmatpush2.msra.mxu0 0.0
    %659 = vmatprep.subr.mxu0 0.0
    %660 = vmatpush2.msra.mxu0 0.0
    %661 = vmatprep.subr.mxu0 0.0
    %662 = vmatpush2.msra.mxu0 0.0
    %663 = vmatprep.subr.mxu0 0.0
    %664 = vmatpush2.msra.mxu0 0.0
    %665 = vmatprep.subr.mxu0 0.0
    %666 = vmatpush2.msra.mxu0 0.0
    %667 = vmatprep.subr.mxu0 0.0
    %668 = vmatpush2.msra.mxu0 %v609
    %669 = vmatprep.subr.mxu0 0.0
    %670 = vmatpush2.msra.mxu0 %v608
    %671 = vmatprep.subr.mxu0 0.0
    %672 = vmatpush2.msra.mxu0 %v607
    %673 = vmatprep.subr.mxu0 0.0
    %674 = vmatpush2.msra.mxu0 %v606
    %675 = vmatprep.subr.mxu0 0.0
    %676 = vmatpush2.msra.mxu0 %v605
    %677 = vmatprep.subr.mxu0 0.0
    %678 = vmatpush2.msra.mxu0 %v604
    %679 = vmatprep.subr.mxu0 0.0
    %680 = vmatpush2.msra.mxu0 %v603
    %681 = vmatprep.subr.mxu0 0.0
    %682 = vmatpush2.msra.mxu0 %v602
    %683 = vmatprep.subr.mxu0 0.0
    %684 = vmatpush2.msra.mxu0 %v601
    %685 = vmatprep.mubr.f32.mxu0 %v619
    %686 = vmatmul.mubr.f32.gmra.mxu0 %v583
    %v687 = vpop.f32.mrf.mxu0
    %v688 = vadd.f32 %v615, %v687
    %v689 = vpop.f32.mrf.mxu0
    %690 = vdwg.mxu0
    %vm691 = vcmask 64512
    %692 = vst.msk [vmem:[#allocation2] sm:$0xff] %vm691, %v688
    // Predicated region
    $region30: #{tpu_custom_call.1} parent=1 // pred_check
      _
    $region31: #{tpu_custom_call.1} parent=1 // pred_check_branch
      %694 = sbr.rel (0) target = $region33
    $region32: #{tpu_custom_call.1} parent=1 // pred_region
      %s696 = ssub.s32 128, 128
      %697 = vsyncadd [#allocation3], %s696
      %s699 = sshll.u32 [#allocation2], 4
      %s700 = int_to_ptr.vmem [resolvable:$true] %s699
      %702 = dma.vmem_to_hbm [thread:$0]  %s700, 128, %s7, [#allocation3]
    $region33: #{tpu_custom_call.1} parent=1 // pred_fallthru
      _
    // Predicated region
    $region34: #{tpu_custom_call.1} parent=1 // pred_check
      _
    $region35: #{tpu_custom_call.1} parent=1 // pred_check_branch
      %704 = sbr.rel (0) target = $region37
    $region36: #{tpu_custom_call.1} parent=1 // pred_region
      %705 = dma.done [#allocation3], 128
    $region37: #{tpu_custom_call.1} parent=1 // pred_fallthru
      _
    %706 = vsyncpa [#allocation3], 1

</llo_original>
